<compile_context>
chip_gen: v7x
topology: tpu7x:2x2x1
jax: 0.10.0
libtpu: 0.0.40
codegen_flags: <defaults>
</compile_context>

<pallas_src>
import jax
import jax.numpy as jnp
from jax.experimental import pallas as pl
from jax.experimental.pallas import tpu as pltpu


def _fused_classifier_kernel(x_ref, w_ref, b_ref, o_ref):
    # Single fused matmul on the MXU, f32 accumulation, bias add in f32.
    y = jnp.dot(x_ref[...], w_ref[...], preferred_element_type=jnp.float32)
    o_ref[...] = (y + b_ref[...]).astype(o_ref.dtype)


def simple_classifier(x, w1, b1, w2, b2, *, tile_b=256, compute_dtype=None):
    """Eval-mode forward of SimpleClassifier as one Pallas matmul kernel.

    x : (B, in_f)
    w1: (in_f, hidden)   b1: (1, hidden)     (weights stored pre-transposed)
    w2: (hidden, out_f)  b2: (1, out_f)

    compute_dtype: optionally cast x and the fused weight to e.g. bf16 at the
    call boundary (halves HBM bytes / doubles MXU rate on v6e/v7x); the matmul
    still accumulates in f32 and the bias add stays in f32.
    """
    # TODO(synk): training-mode dropout (pltpu.prng_random_bits + mask/scale)
    #             is not implemented; this path (and the algebraic fusion) is
    #             exactly module.eval() semantics only.
    out_dtype = x.dtype
    B, in_f = x.shape
    out_f = w2.shape[1]

    # --- Algebraic fusion (plain JAX, done once per call; tiny weights). ---
    w = jnp.dot(w1, w2)                                  # (in_f, out_f)
    b = (jnp.dot(b1, w2) + b2).astype(jnp.float32)       # (1, out_f)

    # --- Lane-dense output: pad out_f up to a multiple of 128. ---
    out_p = max(128, ((out_f + 127) // 128) * 128)
    if out_p != out_f:
        w = jnp.pad(w, ((0, 0), (0, out_p - out_f)))
        b = jnp.pad(b, ((0, 0), (0, out_p - out_f)))

    # Optional reduced-precision matmul operands (f32 accumulate in kernel).
    if compute_dtype is not None:
        x = x.astype(compute_dtype)
        w = w.astype(compute_dtype)

    # --- Batch tiling. Small batches: single block (== full dim, so the
    #     (8,128) rule is satisfied). Large batches: tile_b-row tiles,
    #     padding B up to a multiple of tile_b. ---
    if B <= tile_b:
        tb = B
        Bp = B
    else:
        tb = tile_b
        Bp = ((B + tb - 1) // tb) * tb
        if Bp != B:
            x = jnp.pad(x, ((0, Bp - B), (0, 0)))

    grid = (Bp // tb,)
    itemsize = jnp.dtype(x.dtype).itemsize

    out = pl.pallas_call(
        _fused_classifier_kernel,
        out_shape=jax.ShapeDtypeStruct((Bp, out_p), out_dtype),
        grid=grid,
        in_specs=[
            # x tiles stream over the batch axis.
            pl.BlockSpec((tb, in_f), lambda i: (i, 0)),
            # Fused weight / bias: constant index_map -> VMEM-resident
            # across all grid steps (no re-DMA per tile).
            pl.BlockSpec((in_f, out_p), lambda i: (0, 0)),
            pl.BlockSpec((1, out_p), lambda i: (0, 0)),
        ],
        out_specs=pl.BlockSpec((tb, out_p), lambda i: (i, 0)),
        compiler_params=pltpu.CompilerParams(
            # Batch axis is embarrassingly parallel -> megacore split on v7x.
            dimension_semantics=("parallel",),
        ),
        cost_estimate=pl.CostEstimate(
            flops=2 * Bp * in_f * out_p,
            transcendentals=0,
            bytes_accessed=(Bp * in_f + in_f * out_p) * itemsize
            + Bp * out_p * jnp.dtype(out_dtype).itemsize,
        ),
    )(x, w, b)

    return out[:B, :out_f]


def init_params(key, in_features, out_features, reduction=16, dtype=jnp.float32):
    """Deterministic init mimicking nn.Linear default (U[-1/sqrt(fan_in), +1/sqrt(fan_in)])."""
    hidden = in_features // reduction
    k1, k2, k3, k4 = jax.random.split(key, 4)
    bound1 = 1.0 / jnp.sqrt(in_features)
    bound2 = 1.0 / jnp.sqrt(hidden)
    # Store weights already transposed: (in, hidden) and (hidden, out).
    w1 = jax.random.uniform(k1, (in_features, hidden), dtype, -bound1, bound1)
    b1 = jax.random.uniform(k2, (1, hidden), dtype, -bound1, bound1)
    w2 = jax.random.uniform(k3, (hidden, out_features), dtype, -bound2, bound2)
    b2 = jax.random.uniform(k4, (1, out_features), dtype, -bound2, bound2)
    return w1, b1, w2, b2


if __name__ == "__main__":
    key = jax.random.PRNGKey(0)
    k_x, k_p, k_x2 = jax.random.split(key, 3)

    batch = 2
    in_features = 256
    out_features = 8
    reduction = 16

    x = jax.random.normal(k_x, (batch, in_features), dtype=jnp.float32)
    w1, b1, w2, b2 = init_params(k_p, in_features, out_features, reduction)

    # Small-batch path (single block, grid of 1).
    out = simple_classifier(x, w1, b1, w2, b2)
    out = jax.block_until_ready(out)

    ref = (x @ w1 + b1) @ w2 + b2  # eval-mode dropout = identity
    assert out.shape == (batch, out_features)
    assert jnp.allclose(out, ref, atol=1e-4, rtol=1e-4)

    # Larger batch exercises the tiled path (grid > 1, batch padding, resident weights).
    batch2 = 520
    x2 = jax.random.normal(k_x2, (batch2, in_features), dtype=jnp.float32)
    out2 = jax.block_until_ready(simple_classifier(x2, w1, b1, w2, b2))
    ref2 = (x2 @ w1 + b1) @ w2 + b2
    assert out2.shape == (batch2, out_features)
    assert jnp.allclose(out2, ref2, atol=1e-4, rtol=1e-4)

    print("KERNEL_OK")
</pallas_src>

<mosaic_0001>
module attributes {stable_mosaic.version = 11 : i64} {
  func.func @_fused_classifier_kernel(%arg0: i32, %arg1: memref<2x256xf32, #tpu.memory_space<vmem>>, %arg2: memref<256x128xf32, #tpu.memory_space<vmem>>, %arg3: memref<1x128xf32, #tpu.memory_space<vmem>>, %arg4: memref<2x128xf32, #tpu.memory_space<vmem>>) attributes {dimension_semantics = [#tpu.dimension_semantics<parallel>], iteration_bounds = array<i64: 1>, scalar_prefetch = 0 : i64, scratch_operands = 0 : i64, tpu.core_type = #tpu.core_type<tc>, window_params = [{transform_indices = @transform_0, window_bounds = array<i64: 2, 256>}, {pipeline_mode = #tpu.pipeline_mode<synchronous>, transform_indices = @transform_1, window_bounds = array<i64: 256, 128>}, {pipeline_mode = #tpu.pipeline_mode<synchronous>, transform_indices = @transform_2, window_bounds = array<i64: 1, 128>}, {transform_indices = @transform_3, window_bounds = array<i64: 2, 128>}]} {
    %c0 = arith.constant 0 : index
    %c0_0 = arith.constant 0 : index
    %0 = vector.load %arg1[%c0, %c0_0] : memref<2x256xf32, #tpu.memory_space<vmem>>, vector<2x256xf32>
    %c0_1 = arith.constant 0 : index
    %c0_2 = arith.constant 0 : index
    %1 = vector.load %arg2[%c0_1, %c0_2] : memref<256x128xf32, #tpu.memory_space<vmem>>, vector<256x128xf32>
    %cst = arith.constant dense<0.000000e+00> : vector<2x128xf32>
    %2 = tpu.matmul %0, %1, %cst {dimension_numbers = #tpu.dot_dimension_numbers<[1], [0], [0], [1], [0, 0, 1, 1], [], []>} : vector<2x256xf32>, vector<256x128xf32>, vector<2x128xf32> -> vector<2x128xf32>
    %c0_3 = arith.constant 0 : index
    %c0_4 = arith.constant 0 : index
    %3 = vector.load %arg3[%c0_3, %c0_4] : memref<1x128xf32, #tpu.memory_space<vmem>>, vector<1x128xf32>
    %4 = vector.broadcast %3 : vector<1x128xf32> to vector<2x128xf32>
    %5 = arith.addf %2, %4 : vector<2x128xf32>
    %c0_5 = arith.constant 0 : index
    %c0_6 = arith.constant 0 : index
    %6 = vector.load %arg4[%c0_5, %c0_6] : memref<2x128xf32, #tpu.memory_space<vmem>>, vector<2x128xf32>
    tpu.vector_store %arg4[%c0_5, %c0_6], %5 {strides = array<i32>} : memref<2x128xf32, #tpu.memory_space<vmem>>, vector<2x128xf32>,
    return
  }
  func.func @transform_0(%arg0: i32) -> (i32, i32) {
    %c0_i32 = arith.constant 0 : i32
    %c0_i32_0 = arith.constant 0 : i32
    return %arg0, %c0_i32 : i32, i32
  }
  func.func @transform_1(%arg0: i32) -> (i32, i32) {
    %c0_i32 = arith.constant 0 : i32
    %c0_i32_0 = arith.constant 0 : i32
    %c0_i32_1 = arith.constant 0 : i32
    return %c0_i32, %c0_i32_0 : i32, i32
  }
  func.func @transform_2(%arg0: i32) -> (i32, i32) {
    %c0_i32 = arith.constant 0 : i32
    %c0_i32_0 = arith.constant 0 : i32
    %c0_i32_1 = arith.constant 0 : i32
    return %c0_i32, %c0_i32_0 : i32, i32
  }
  func.func @transform_3(%arg0: i32) -> (i32, i32) {
    %c0_i32 = arith.constant 0 : i32
    %c0_i32_0 = arith.constant 0 : i32
    return %arg0, %c0_i32 : i32, i32
  }
}

</mosaic_0001>

<llo_original>
// kernel: tpu_custom_call.1
$region0: #{tpu_custom_call.1}
  #allocation0 [shape = 'u32[]', space=smem, size = 0x4, offset = 0x4, fixed_abs, tag = 'smem constant byte address 0x4 - core index']
  #allocation1 [shape = 'u32[144,128]{1,0:T(1,128)}', space=vmem, size = 0x12000, scoped, tag = 'internal scratch']
  %s0 = inlined_call_operand.hbm [shape: f32[2,256], index: 0, kind: input, shape index: {}]
  %s1 = inlined_call_operand.hbm [shape: f32[256,128], index: 1, kind: input, shape index: {}]
  %s2 = inlined_call_operand.vmem [shape: f32[1,128], index: 2, kind: input, shape index: {}]
  %s3 = inlined_call_operand.hbm [shape: f32[2,128], index: 3, kind: output, shape index: {}]
  %s4 = sld [smem:[#allocation0]]
  $region30: #{tpu_custom_call.1} parent=0
    _
  %s6 = ssub.s32 1, %s4
  %s7 = scalar_select 0, %s6, %s4
  $region1: #{tpu_custom_call.1} parent=0
    #allocation2 [shape = 'u8[2048]{0}', space=vmem, size = 0x800, scoped, tag = 'input window, operand 0, single buffered']
    #allocation3 [shape = 's32[1]{0}', space=sflag, size = 0x4, scoped, tag = 'scoped memory for tpu_custom_call.1']
    #allocation4 [shape = 's32[1]{0}', space=sflag, size = 0x4, scoped, tag = 'scoped memory for tpu_custom_call.1']
    #allocation5 [shape = 'u8[131072]{0}', space=vmem, size = 0x20000, scoped, tag = 'input window, operand 1, single buffered']
    #allocation6 [shape = 's32[1]{0}', space=sflag, size = 0x4, scoped, tag = 'scoped memory for tpu_custom_call.1']
    #allocation7 [shape = 'u8[1024]{0}', space=vmem, size = 0x400, scoped, tag = 'output window, operand 0, single buffered']
    %8 = vsyncpa [#allocation3], 0
    %9 = vsyncpa [#allocation6], 0
    %10 = vsyncpa [#allocation4], 0
    // Predicated region
    $region2: #{tpu_custom_call.1} parent=1 // pred_check
      _
    $region3: #{tpu_custom_call.1} parent=1 // pred_check_branch
      %12 = sbr.rel (0) target = $region5
    $region4: #{tpu_custom_call.1} parent=1 // pred_region
      %s14 = ssub.s32 64, 64
      %15 = vsyncadd [#allocation3], %s14
      %s17 = sshll.u32 [#allocation2], 4
      %s18 = int_to_ptr.vmem [resolvable:$true] %s17
      %20 = dma.hbm_to_vmem [thread:$0]  %s0, 64, %s18, [#allocation3]
    $region5: #{tpu_custom_call.1} parent=1 // pred_fallthru
      _
    // Predicated region
    $region6: #{tpu_custom_call.1} parent=1 // pred_check
      _
    $region7: #{tpu_custom_call.1} parent=1 // pred_check_branch
      %22 = sbr.rel (0) target = $region9
    $region8: #{tpu_custom_call.1} parent=1 // pred_region
      %s24 = ssub.s32 4096, 4096
      %25 = vsyncadd [#allocation6], %s24
      %s26 = sshll.u32 [#allocation5], 4
      %s27 = int_to_ptr.vmem [resolvable:$true] %s26
      %32 = dma.hbm_to_vmem [thread:$0]  %s1, 4096, %s27, [#allocation6], 128, 128, 8
    $region9: #{tpu_custom_call.1} parent=1 // pred_fallthru
      _
    // Predicated region
    $region10: #{tpu_custom_call.1} parent=1 // pred_check
      _
    $region11: #{tpu_custom_call.1} parent=1 // pred_check_branch
      %34 = sbr.rel (0) target = $region13
    $region12: #{tpu_custom_call.1} parent=1 // pred_region
      _
    $region13: #{tpu_custom_call.1} parent=1 // pred_fallthru
      _
    // Predicated region
    $region14: #{tpu_custom_call.1} parent=1 // pred_check
      _
    $region15: #{tpu_custom_call.1} parent=1 // pred_check_branch
      %36 = sbr.rel (0) target = $region17
    $region16: #{tpu_custom_call.1} parent=1 // pred_region
      %37 = dma.done [#allocation3], 64
    $region17: #{tpu_custom_call.1} parent=1 // pred_fallthru
      _
    // Predicated region
    $region18: #{tpu_custom_call.1} parent=1 // pred_check
      _
    $region19: #{tpu_custom_call.1} parent=1 // pred_check_branch
      %39 = sbr.rel (0) target = $region21
    $region20: #{tpu_custom_call.1} parent=1 // pred_region
      %40 = dma.done [#allocation6], 4096
    $region21: #{tpu_custom_call.1} parent=1 // pred_fallthru
      _
    %v41 = vld [vmem:[#allocation2] sm:$0xf]
    %v42 = vld [vmem:[#allocation5] sm:$0xff]
    %v43 = vld [vmem:[#allocation5 + $0x8] sm:$0xff]
    %v44 = vld [vmem:[#allocation5 + $0x10] sm:$0xff]
    %v45 = vld [vmem:[#allocation5 + $0x18] sm:$0xff]
    %v46 = vld [vmem:[#allocation5 + $0x20] sm:$0xff]
    %v47 = vld [vmem:[#allocation5 + $0x28] sm:$0xff]
    %v48 = vld [vmem:[#allocation5 + $0x30] sm:$0xff]
    %v49 = vld [vmem:[#allocation5 + $0x38] sm:$0xff]
    %v50 = vld [vmem:[#allocation5 + $0x40] sm:$0xff]
    %v51 = vld [vmem:[#allocation5 + $0x48] sm:$0xff]
    %v52 = vld [vmem:[#allocation5 + $0x50] sm:$0xff]
    %v53 = vld [vmem:[#allocation5 + $0x58] sm:$0xff]
    %v54 = vld [vmem:[#allocation5 + $0x60] sm:$0xff]
    %v55 = vld [vmem:[#allocation5 + $0x68] sm:$0xff]
    %v56 = vld [vmem:[#allocation5 + $0x70] sm:$0xff]
    %v57 = vld [vmem:[#allocation5 + $0x78] sm:$0xff]
    %v58 = vld [vmem:[#allocation5 + $0x80] sm:$0xff]
    %v59 = vld [vmem:[#allocation5 + $0x88] sm:$0xff]
    %v60 = vld [vmem:[#allocation5 + $0x90] sm:$0xff]
    %v61 = vld [vmem:[#allocation5 + $0x98] sm:$0xff]
    %v62 = vld [vmem:[#allocation5 + $0xa0] sm:$0xff]
    %v63 = vld [vmem:[#allocation5 + $0xa8] sm:$0xff]
    %v64 = vld [vmem:[#allocation5 + $0xb0] sm:$0xff]
    %v65 = vld [vmem:[#allocation5 + $0xb8] sm:$0xff]
    %v66 = vld [vmem:[#allocation5 + $0xc0] sm:$0xff]
    %v67 = vld [vmem:[#allocation5 + $0xc8] sm:$0xff]
    %v68 = vld [vmem:[#allocation5 + $0xd0] sm:$0xff]
    %v69 = vld [vmem:[#allocation5 + $0xd8] sm:$0xff]
    %v70 = vld [vmem:[#allocation5 + $0xe0] sm:$0xff]
    %v71 = vld [vmem:[#allocation5 + $0xe8] sm:$0xff]
    %v72 = vld [vmem:[#allocation5 + $0xf0] sm:$0xff]
    %v73 = vld [vmem:[#allocation5 + $0xf8] sm:$0xff]
    %v74 = vld [vmem:[%s2] sm:$0x1]
    %v76 = vlaneseq
    %v77 = vshrl.u32 %v76, 7
    %v78 = vsub.s32 0, %v77
    %v79 = vrot.slane %v74, %v78
    %v83 = vunpack.c.l.s4 1983009808
    %v84 = vunpack.c.0.s8 %v83
    %v85 = vlaneseq
    %v86 = vshrl.u32 %v85, 7
    %v87 = vsub.s32 %v84, %v86
    %v88 = vrot.slane %v41, %v87
    %v89 = vcombine.high %v88, %v88
    %92 = vmatprep.subr.mxu0 0.0
    %93 = vmatpush1.msra.mxu0 %v42
    %94 = vmatprep.subr.mxu0 0.0
    %95 = vmatpush1.msra.mxu0 %v43
    %96 = vmatprep.subr.mxu0 0.0
    %97 = vmatpush1.msra.mxu0 %v44
    %98 = vmatprep.subr.mxu0 0.0
    %99 = vmatpush1.msra.mxu0 %v45
    %100 = vmatprep.subr.mxu0 0.0
    %101 = vmatpush1.msra.mxu0 %v46
    %102 = vmatprep.subr.mxu0 0.0
    %103 = vmatpush1.msra.mxu0 %v47
    %104 = vmatprep.subr.mxu0 0.0
    %105 = vmatpush1.msra.mxu0 %v48
    %106 = vmatprep.subr.mxu0 0.0
    %107 = vmatpush1.msra.mxu0 %v49
    %108 = vmatprep.subr.mxu0 0.0
    %109 = vmatpush1.msra.mxu0 %v50
    %110 = vmatprep.subr.mxu0 0.0
    %111 = vmatpush1.msra.mxu0 %v51
    %112 = vmatprep.subr.mxu0 0.0
    %113 = vmatpush1.msra.mxu0 %v52
    %114 = vmatprep.subr.mxu0 0.0
    %115 = vmatpush1.msra.mxu0 %v53
    %116 = vmatprep.subr.mxu0 0.0
    %117 = vmatpush1.msra.mxu0 %v54
    %118 = vmatprep.subr.mxu0 0.0
    %119 = vmatpush1.msra.mxu0 %v55
    %120 = vmatprep.subr.mxu0 0.0
    %121 = vmatpush1.msra.mxu0 %v56
    %122 = vmatprep.subr.mxu0 0.0
    %123 = vmatpush1.msra.mxu0 %v57
    %124 = vmatprep.subr.mxu0 0.0
    %125 = vmatpush1.msra.mxu0 %v58
    %126 = vmatprep.subr.mxu0 0.0
    %127 = vmatpush1.msra.mxu0 %v59
    %128 = vmatprep.subr.mxu0 0.0
    %129 = vmatpush1.msra.mxu0 %v60
    %130 = vmatprep.subr.mxu0 0.0
    %131 = vmatpush1.msra.mxu0 %v61
    %132 = vmatprep.subr.mxu0 0.0
    %133 = vmatpush1.msra.mxu0 %v62
    %134 = vmatprep.subr.mxu0 0.0
    %135 = vmatpush1.msra.mxu0 %v63
    %136 = vmatprep.subr.mxu0 0.0
    %137 = vmatpush1.msra.mxu0 %v64
    %138 = vmatprep.subr.mxu0 0.0
    %139 = vmatpush1.msra.mxu0 %v65
    %140 = vmatprep.subr.mxu0 0.0
    %141 = vmatpush1.msra.mxu0 %v66
    %142 = vmatprep.subr.mxu0 0.0
    %143 = vmatpush1.msra.mxu0 %v67
    %144 = vmatprep.subr.mxu0 0.0
    %145 = vmatpush1.msra.mxu0 %v68
    %146 = vmatprep.subr.mxu0 0.0
    %147 = vmatpush1.msra.mxu0 %v69
    %148 = vmatprep.subr.mxu0 0.0
    %149 = vmatpush1.msra.mxu0 %v70
    %150 = vmatprep.subr.mxu0 0.0
    %151 = vmatpush1.msra.mxu0 %v71
    %152 = vmatprep.subr.mxu0 0.0
    %153 = vmatpush1.msra.mxu0 %v72
    %154 = vmatprep.subr.mxu0 0.0
    %155 = vmatpush1.msra.mxu0 %v73
    %156 = vmatprep.mubr.f32.mxu0 %v89
    %157 = vmatmul.mubr.f32.gmra.mrb[0].mxu0 %v88
    %v158 = vpop.f32.mrb[0].mxu0
    %v159 = vadd.f32 %v79, %v158
    %v160 = vpop.f32.mrb[0].mxu0
    %161 = vdwg.mxu0
    %162 = vst [vmem:[#allocation7] sm:$0x3] %v159
    // Predicated region
    $region22: #{tpu_custom_call.1} parent=1 // pred_check
      _
    $region23: #{tpu_custom_call.1} parent=1 // pred_check_branch
      %164 = sbr.rel (0) target = $region25
    $region24: #{tpu_custom_call.1} parent=1 // pred_region
      %s166 = ssub.s32 32, 32
      %167 = vsyncadd [#allocation4], %s166
      %s169 = sshll.u32 [#allocation7], 4
      %s170 = int_to_ptr.vmem [resolvable:$true] %s169
      %172 = dma.vmem_to_hbm [thread:$0]  %s170, 32, %s3, [#allocation4]
    $region25: #{tpu_custom_call.1} parent=1 // pred_fallthru
      _
    // Predicated region
    $region26: #{tpu_custom_call.1} parent=1 // pred_check
      _
    $region27: #{tpu_custom_call.1} parent=1 // pred_check_branch
      %174 = sbr.rel (0) target = $region29
    $region28: #{tpu_custom_call.1} parent=1 // pred_region
      %175 = dma.done [#allocation4], 32
    $region29: #{tpu_custom_call.1} parent=1 // pred_fallthru
      _
    %176 = vsyncpa [#allocation3], 1
    %177 = vsyncpa [#allocation6], 1
    %178 = vsyncpa [#allocation4], 1

</llo_original>
